<compile_context>
chip_gen: v5e
topology: v5e:2x2
jax: 0.10.0
libtpu: 0.0.40
codegen_flags: <defaults>
</compile_context>

<pallas_src>
import functools

import jax
import jax.numpy as jnp
from jax.experimental import pallas as pl
from jax.experimental.pallas import tpu as pltpu

LANE = 128
SUBLANE = 8
MAX_BATCH_TILE = 512  # rows per grid step; whole weight set + tile fit VMEM easily


def _round_up(n, m):
    return ((n + m - 1) // m) * m


def _mlp_kernel(num_layers, x_ref, *refs):
    """Fused MLP: (Linear -> ReLU) * (L-1) -> Linear on one batch tile.

    refs = (w0, b0, w1, b1, ..., w_{L-1}, b_{L-1}, out_ref)
    All operands are already lane-dense (feature dims padded to 128).
    """
    out_ref = refs[-1]
    h = x_ref[...]                                   # (tm, 128) f32
    for i in range(num_layers):
        w = refs[2 * i][...]                         # (128k, 128m) f32
        b = refs[2 * i + 1][...]                     # (1, 128m)    f32
        h = jnp.dot(h, w, preferred_element_type=jnp.float32) + b
        if i < num_layers - 1:                       # ReLU on hidden layers only
            h = jnp.maximum(h, 0.0)
    out_ref[...] = h.astype(out_ref.dtype)           # lane-dense (tm, 128) store


def pad_params(weights, biases):
    """One-time zero-padding of weights/biases to lane-dense (mult-of-128) shapes.

    Padding is semantics-preserving: padded K rows are zero (ignore padded input
    lanes), padded N cols produce exactly-zero activations (zero weight cols +
    zero bias), which stay zero through ReLU and the next layer's zero K rows.
    """
    pw, pb = [], []
    for w, b in zip(weights, biases):
        di, do = w.shape
        dip, dop = _round_up(di, LANE), _round_up(do, LANE)
        wp = jnp.zeros((dip, dop), jnp.float32).at[:di, :do].set(w)
        bp = jnp.zeros((1, dop), jnp.float32).at[:, :do].set(jnp.reshape(b, (1, -1)))
        pw.append(wp)
        pb.append(bp)
    return pw, pb


def blackbox_mlp(x, weights, biases):
    """Run the fused MLP Pallas kernel.

    x:       (B, input_dim) float32
    weights: list of (d_in, d_out) float32
    biases:  list of (1, d_out) float32
    returns: (B, output_dim) float32
    """
    B, d_in = x.shape
    out_dim = weights[-1].shape[1]
    num_layers = len(weights)

    pw, pb = pad_params(weights, biases)
    d_in_p = pw[0].shape[0]
    out_p = pw[-1].shape[1]

    # Batch tile: whole (padded) batch if small, else MAX_BATCH_TILE rows/step.
    Bp = _round_up(B, SUBLANE)
    tm = min(Bp, MAX_BATCH_TILE)
    Bp = _round_up(Bp, tm)
    n_tiles = Bp // tm

    # Zero-pad the input once (batch to tile multiple, features to 128 lanes).
    xp = jnp.zeros((Bp, d_in_p), jnp.float32).at[:B, :d_in].set(x)

    # x / out tile along the batch grid axis; weights & biases are fully
    # resident (constant block index -> fetched once, reused every step).
    in_specs = [pl.BlockSpec((tm, d_in_p), lambda i: (i, 0))]
    params = []
    for w, b in zip(pw, pb):
        in_specs.append(pl.BlockSpec(w.shape, lambda i: (0, 0)))
        in_specs.append(pl.BlockSpec(b.shape, lambda i: (0, 0)))
        params.extend([w, b])
    out_spec = pl.BlockSpec((tm, out_p), lambda i: (i, 0))

    kernel = functools.partial(_mlp_kernel, num_layers)

    out_padded = pl.pallas_call(
        kernel,
        out_shape=jax.ShapeDtypeStruct((Bp, out_p), jnp.float32),
        grid_spec=pltpu.PrefetchScalarGridSpec(
            num_scalar_prefetch=0,
            grid=(n_tiles,),
            in_specs=in_specs,
            out_specs=out_spec,
        ),
        compiler_params=pltpu.CompilerParams(
            dimension_semantics=("parallel",),
        ),
    )(xp, *params)

    # Slice the lane-dense slab back to the true output shape outside the kernel.
    return out_padded[:B, :out_dim]


def init_params(key, input_dim, hidden_dims, output_dim):
    """Deterministic parameter init (matches the nn.Linear shapes of BlackBoxNN)."""
    dims = [input_dim] + list(hidden_dims) + [output_dim]
    weights, biases = [], []
    for i in range(len(dims) - 1):
        key, kw, kb = jax.random.split(key, 3)
        fan_in = dims[i]
        bound = 1.0 / jnp.sqrt(fan_in)
        w = jax.random.uniform(kw, (dims[i], dims[i + 1]), jnp.float32, -bound, bound)
        b = jax.random.uniform(kb, (1, dims[i + 1]), jnp.float32, -bound, bound)
        weights.append(w)
        biases.append(b)
    return weights, biases


def reference_mlp(x, weights, biases):
    h = x
    for i, (w, b) in enumerate(zip(weights, biases)):
        h = h @ w + b
        if i < len(weights) - 1:
            h = jnp.maximum(h, 0.0)
    return h


if __name__ == "__main__":
    input_dim = 16
    hidden_dims = [32, 64]
    output_dim = 1
    batch = 64

    key = jax.random.PRNGKey(0)
    key, kx = jax.random.split(key)
    x = jax.random.normal(kx, (batch, input_dim), jnp.float32)
    weights, biases = init_params(key, input_dim, hidden_dims, output_dim)

    out = blackbox_mlp(x, weights, biases)
    out = jax.block_until_ready(out)

    ref = reference_mlp(x, weights, biases)
    assert out.shape == (batch, output_dim)
    assert jnp.allclose(out, ref, atol=1e-5, rtol=1e-5), "mismatch vs reference"

    print("KERNEL_OK")
</pallas_src>

<mosaic_0001>
module attributes {stable_mosaic.version = 11 : i64} {
  func.func @_mlp_kernel(%arg0: i32, %arg1: memref<64x128xf32, #tpu.memory_space<vmem>>, %arg2: memref<128x128xf32, #tpu.memory_space<vmem>>, %arg3: memref<1x128xf32, #tpu.memory_space<vmem>>, %arg4: memref<128x128xf32, #tpu.memory_space<vmem>>, %arg5: memref<1x128xf32, #tpu.memory_space<vmem>>, %arg6: memref<128x128xf32, #tpu.memory_space<vmem>>, %arg7: memref<1x128xf32, #tpu.memory_space<vmem>>, %arg8: memref<64x128xf32, #tpu.memory_space<vmem>>) attributes {dimension_semantics = [#tpu.dimension_semantics<parallel>], iteration_bounds = array<i64: 1>, scalar_prefetch = 0 : i64, scratch_operands = 0 : i64, tpu.core_type = #tpu.core_type<tc>, window_params = [{transform_indices = @transform_0, window_bounds = array<i64: 64, 128>}, {pipeline_mode = #tpu.pipeline_mode<synchronous>, transform_indices = @transform_1, window_bounds = array<i64: 128, 128>}, {pipeline_mode = #tpu.pipeline_mode<synchronous>, transform_indices = @transform_2, window_bounds = array<i64: 1, 128>}, {pipeline_mode = #tpu.pipeline_mode<synchronous>, transform_indices = @transform_3, window_bounds = array<i64: 128, 128>}, {pipeline_mode = #tpu.pipeline_mode<synchronous>, transform_indices = @transform_4, window_bounds = array<i64: 1, 128>}, {pipeline_mode = #tpu.pipeline_mode<synchronous>, transform_indices = @transform_5, window_bounds = array<i64: 128, 128>}, {pipeline_mode = #tpu.pipeline_mode<synchronous>, transform_indices = @transform_6, window_bounds = array<i64: 1, 128>}, {transform_indices = @transform_7, window_bounds = array<i64: 64, 128>}]} {
    %c0 = arith.constant 0 : index
    %c0_0 = arith.constant 0 : index
    %0 = vector.load %arg1[%c0, %c0_0] : memref<64x128xf32, #tpu.memory_space<vmem>>, vector<64x128xf32>
    %c0_1 = arith.constant 0 : index
    %c0_2 = arith.constant 0 : index
    %1 = vector.load %arg2[%c0_1, %c0_2] : memref<128x128xf32, #tpu.memory_space<vmem>>, vector<128x128xf32>
    %c0_3 = arith.constant 0 : index
    %c0_4 = arith.constant 0 : index
    %2 = vector.load %arg3[%c0_3, %c0_4] : memref<1x128xf32, #tpu.memory_space<vmem>>, vector<1x128xf32>
    %cst = arith.constant dense<0.000000e+00> : vector<64x128xf32>
    %3 = tpu.matmul %0, %1, %cst {dimension_numbers = #tpu.dot_dimension_numbers<[1], [0], [0], [1], [0, 0, 1, 1], [], []>} : vector<64x128xf32>, vector<128x128xf32>, vector<64x128xf32> -> vector<64x128xf32>
    %4 = vector.broadcast %2 : vector<1x128xf32> to vector<64x128xf32>
    %5 = arith.addf %3, %4 : vector<64x128xf32>
    %cst_5 = arith.constant 0.000000e+00 : f32
    %6 = vector.broadcast %cst_5 : f32 to vector<64x128xf32>
    %7 = arith.maximumf %5, %6 : vector<64x128xf32>
    %c0_6 = arith.constant 0 : index
    %c0_7 = arith.constant 0 : index
    %8 = vector.load %arg4[%c0_6, %c0_7] : memref<128x128xf32, #tpu.memory_space<vmem>>, vector<128x128xf32>
    %c0_8 = arith.constant 0 : index
    %c0_9 = arith.constant 0 : index
    %9 = vector.load %arg5[%c0_8, %c0_9] : memref<1x128xf32, #tpu.memory_space<vmem>>, vector<1x128xf32>
    %cst_10 = arith.constant dense<0.000000e+00> : vector<64x128xf32>
    %10 = tpu.matmul %7, %8, %cst_10 {dimension_numbers = #tpu.dot_dimension_numbers<[1], [0], [0], [1], [0, 0, 1, 1], [], []>} : vector<64x128xf32>, vector<128x128xf32>, vector<64x128xf32> -> vector<64x128xf32>
    %11 = vector.broadcast %9 : vector<1x128xf32> to vector<64x128xf32>
    %12 = arith.addf %10, %11 : vector<64x128xf32>
    %cst_11 = arith.constant 0.000000e+00 : f32
    %13 = vector.broadcast %cst_11 : f32 to vector<64x128xf32>
    %14 = arith.maximumf %12, %13 : vector<64x128xf32>
    %c0_12 = arith.constant 0 : index
    %c0_13 = arith.constant 0 : index
    %15 = vector.load %arg6[%c0_12, %c0_13] : memref<128x128xf32, #tpu.memory_space<vmem>>, vector<128x128xf32>
    %c0_14 = arith.constant 0 : index
    %c0_15 = arith.constant 0 : index
    %16 = vector.load %arg7[%c0_14, %c0_15] : memref<1x128xf32, #tpu.memory_space<vmem>>, vector<1x128xf32>
    %cst_16 = arith.constant dense<0.000000e+00> : vector<64x128xf32>
    %17 = tpu.matmul %14, %15, %cst_16 {dimension_numbers = #tpu.dot_dimension_numbers<[1], [0], [0], [1], [0, 0, 1, 1], [], []>} : vector<64x128xf32>, vector<128x128xf32>, vector<64x128xf32> -> vector<64x128xf32>
    %18 = vector.broadcast %16 : vector<1x128xf32> to vector<64x128xf32>
    %19 = arith.addf %17, %18 : vector<64x128xf32>
    %c0_17 = arith.constant 0 : index
    %c0_18 = arith.constant 0 : index
    %20 = vector.load %arg8[%c0_17, %c0_18] : memref<64x128xf32, #tpu.memory_space<vmem>>, vector<64x128xf32>
    tpu.vector_store %arg8[%c0_17, %c0_18], %19 {strides = array<i32>} : memref<64x128xf32, #tpu.memory_space<vmem>>, vector<64x128xf32>,
    return
  }
  func.func @transform_0(%arg0: i32) -> (i32, i32) {
    %c0_i32 = arith.constant 0 : i32
    %c0_i32_0 = arith.constant 0 : i32
    return %arg0, %c0_i32 : i32, i32
  }
  func.func @transform_1(%arg0: i32) -> (i32, i32) {
    %c0_i32 = arith.constant 0 : i32
    %c0_i32_0 = arith.constant 0 : i32
    %c0_i32_1 = arith.constant 0 : i32
    return %c0_i32, %c0_i32_0 : i32, i32
  }
  func.func @transform_2(%arg0: i32) -> (i32, i32) {
    %c0_i32 = arith.constant 0 : i32
    %c0_i32_0 = arith.constant 0 : i32
    %c0_i32_1 = arith.constant 0 : i32
    return %c0_i32, %c0_i32_0 : i32, i32
  }
  func.func @transform_3(%arg0: i32) -> (i32, i32) {
    %c0_i32 = arith.constant 0 : i32
    %c0_i32_0 = arith.constant 0 : i32
    %c0_i32_1 = arith.constant 0 : i32
    return %c0_i32, %c0_i32_0 : i32, i32
  }
  func.func @transform_4(%arg0: i32) -> (i32, i32) {
    %c0_i32 = arith.constant 0 : i32
    %c0_i32_0 = arith.constant 0 : i32
    %c0_i32_1 = arith.constant 0 : i32
    return %c0_i32, %c0_i32_0 : i32, i32
  }
  func.func @transform_5(%arg0: i32) -> (i32, i32) {
    %c0_i32 = arith.constant 0 : i32
    %c0_i32_0 = arith.constant 0 : i32
    %c0_i32_1 = arith.constant 0 : i32
    return %c0_i32, %c0_i32_0 : i32, i32
  }
  func.func @transform_6(%arg0: i32) -> (i32, i32) {
    %c0_i32 = arith.constant 0 : i32
    %c0_i32_0 = arith.constant 0 : i32
    %c0_i32_1 = arith.constant 0 : i32
    return %c0_i32, %c0_i32_0 : i32, i32
  }
  func.func @transform_7(%arg0: i32) -> (i32, i32) {
    %c0_i32 = arith.constant 0 : i32
    %c0_i32_0 = arith.constant 0 : i32
    return %arg0, %c0_i32 : i32, i32
  }
}

</mosaic_0001>

<llo_original>
// kernel: tpu_custom_call.1
$region0: #{tpu_custom_call.1}
  #allocation0 [shape = 'u32[]', space=smem, size = 0x4, offset = 0x4, fixed_abs, tag = 'smem constant byte address 0x4 - core index']
  #allocation1 [shape = 'u32[72,128]{1,0:T(1,128)}', space=vmem, size = 0x9000, scoped, tag = 'internal scratch']
  %s0 = inlined_call_operand.hbm [shape: f32[64,128], index: 0, kind: input, shape index: {}]
  %s1 = inlined_call_operand.hbm [shape: f32[128,128], index: 1, kind: input, shape index: {}]
  %s2 = inlined_call_operand.vmem [shape: f32[1,128], index: 2, kind: input, shape index: {}]
  %s3 = inlined_call_operand.hbm [shape: f32[128,128], index: 3, kind: input, shape index: {}]
  %s4 = inlined_call_operand.vmem [shape: f32[1,128], index: 4, kind: input, shape index: {}]
  %s5 = inlined_call_operand.hbm [shape: f32[128,128], index: 5, kind: input, shape index: {}]
  %s6 = inlined_call_operand.vmem [shape: f32[1,128], index: 6, kind: input, shape index: {}]
  %s7 = inlined_call_operand.hbm [shape: f32[64,128], index: 7, kind: output, shape index: {}]
  %s8 = sld [smem:[#allocation0]]
  $region54: #{tpu_custom_call.1} parent=0
    _
  %s10 = ssub.s32 1, %s8
  %s11 = scalar_select 0, %s10, %s8
  $region1: #{tpu_custom_call.1} parent=0
    #allocation2 [shape = 'u8[32768]{0}', space=vmem, size = 0x8000, scoped, tag = 'input window, operand 0, single buffered']
    #allocation3 [shape = 's32[1]{0}', space=sflag, size = 0x4, scoped, tag = 'scoped memory for tpu_custom_call.1']
    #allocation4 [shape = 's32[1]{0}', space=sflag, size = 0x4, scoped, tag = 'scoped memory for tpu_custom_call.1']
    #allocation5 [shape = 'u8[65536]{0}', space=vmem, size = 0x10000, scoped, tag = 'input window, operand 1, single buffered']
    #allocation6 [shape = 's32[1]{0}', space=sflag, size = 0x4, scoped, tag = 'scoped memory for tpu_custom_call.1']
    #allocation7 [shape = 'u8[65536]{0}', space=vmem, size = 0x10000, scoped, tag = 'input window, operand 3, single buffered']
    #allocation8 [shape = 'u8[65536]{0}', space=vmem, size = 0x10000, scoped, tag = 'input window, operand 5, single buffered']
    #allocation9 [shape = 's32[1]{0}', space=sflag, size = 0x4, scoped, tag = 'scoped memory for tpu_custom_call.1']
    #allocation10 [shape = 'u8[32768]{0}', space=vmem, size = 0x8000, scoped, tag = 'output window, operand 0, single buffered']
    %12 = vsyncpa [#allocation3], 0
    %13 = vsyncpa [#allocation6], 0
    %14 = vsyncpa [#allocation9], 0
    %15 = vsyncpa [#allocation4], 0
    // Predicated region
    $region2: #{tpu_custom_call.1} parent=1 // pred_check
      _
    $region3: #{tpu_custom_call.1} parent=1 // pred_check_branch
      %17 = sbr.rel (0) target = $region5
    $region4: #{tpu_custom_call.1} parent=1 // pred_region
      %19 = vsyncadd [#allocation3], 0
      %s20 = sshll.u32 %s0, 4
      %s21 = int_to_ptr.hbm [resolvable:$true] %s20
      %s22 = sshll.u32 [#allocation2], 4
      %s23 = int_to_ptr.vmem [resolvable:$true] %s22
      %28 = dma.hbm_to_vmem [thread:$0]  %s21, 1024, %s23, [#allocation3], 128, 128, 8
    $region5: #{tpu_custom_call.1} parent=1 // pred_fallthru
      _
    // Predicated region
    $region6: #{tpu_custom_call.1} parent=1 // pred_check
      _
    $region7: #{tpu_custom_call.1} parent=1 // pred_check_branch
      %30 = sbr.rel (0) target = $region9
    $region8: #{tpu_custom_call.1} parent=1 // pred_region
      %32 = vsyncadd [#allocation6], 0
      %s33 = sshll.u32 %s1, 4
      %s34 = int_to_ptr.hbm [resolvable:$true] %s33
      %s35 = sshll.u32 [#allocation5], 4
      %s36 = int_to_ptr.vmem [resolvable:$true] %s35
      %41 = dma.hbm_to_vmem [thread:$0]  %s34, 2048, %s36, [#allocation6], 128, 128, 8
    $region9: #{tpu_custom_call.1} parent=1 // pred_fallthru
      _
    // Predicated region
    $region10: #{tpu_custom_call.1} parent=1 // pred_check
      _
    $region11: #{tpu_custom_call.1} parent=1 // pred_check_branch
      %43 = sbr.rel (0) target = $region13
    $region12: #{tpu_custom_call.1} parent=1 // pred_region
      _
    $region13: #{tpu_custom_call.1} parent=1 // pred_fallthru
      _
    // Predicated region
    $region14: #{tpu_custom_call.1} parent=1 // pred_check
      _
    $region15: #{tpu_custom_call.1} parent=1 // pred_check_branch
      %45 = sbr.rel (0) target = $region17
    $region16: #{tpu_custom_call.1} parent=1 // pred_region
      %47 = vsyncadd [#allocation6], 0
      %s48 = sshll.u32 %s3, 4
      %s49 = int_to_ptr.hbm [resolvable:$true] %s48
      %s50 = sshll.u32 [#allocation7], 4
      %s51 = int_to_ptr.vmem [resolvable:$true] %s50
      %56 = dma.hbm_to_vmem [thread:$0]  %s49, 2048, %s51, [#allocation6], 128, 128, 8
    $region17: #{tpu_custom_call.1} parent=1 // pred_fallthru
      _
    // Predicated region
    $region18: #{tpu_custom_call.1} parent=1 // pred_check
      _
    $region19: #{tpu_custom_call.1} parent=1 // pred_check_branch
      %58 = sbr.rel (0) target = $region21
    $region20: #{tpu_custom_call.1} parent=1 // pred_region
      _
    $region21: #{tpu_custom_call.1} parent=1 // pred_fallthru
      _
    // Predicated region
    $region22: #{tpu_custom_call.1} parent=1 // pred_check
      _
    $region23: #{tpu_custom_call.1} parent=1 // pred_check_branch
      %60 = sbr.rel (0) target = $region25
    $region24: #{tpu_custom_call.1} parent=1 // pred_region
      %62 = vsyncadd [#allocation9], 0
      %s63 = sshll.u32 %s5, 4
      %s64 = int_to_ptr.hbm [resolvable:$true] %s63
      %s65 = sshll.u32 [#allocation8], 4
      %s66 = int_to_ptr.vmem [resolvable:$true] %s65
      %71 = dma.hbm_to_vmem [thread:$0]  %s64, 2048, %s66, [#allocation9], 128, 128, 8
    $region25: #{tpu_custom_call.1} parent=1 // pred_fallthru
      _
    // Predicated region
    $region26: #{tpu_custom_call.1} parent=1 // pred_check
      _
    $region27: #{tpu_custom_call.1} parent=1 // pred_check_branch
      %73 = sbr.rel (0) target = $region29
    $region28: #{tpu_custom_call.1} parent=1 // pred_region
      _
    $region29: #{tpu_custom_call.1} parent=1 // pred_fallthru
      _
    // Predicated region
    $region30: #{tpu_custom_call.1} parent=1 // pred_check
      _
    $region31: #{tpu_custom_call.1} parent=1 // pred_check_branch
      %75 = sbr.rel (0) target = $region33
    $region32: #{tpu_custom_call.1} parent=1 // pred_region
      %77 = dma.done [#allocation3], 1024
    $region33: #{tpu_custom_call.1} parent=1 // pred_fallthru
      _
    // Predicated region
    $region34: #{tpu_custom_call.1} parent=1 // pred_check
      _
    $region35: #{tpu_custom_call.1} parent=1 // pred_check_branch
      %79 = sbr.rel (0) target = $region37
    $region36: #{tpu_custom_call.1} parent=1 // pred_region
      %81 = dma.done [#allocation6], 2048
    $region37: #{tpu_custom_call.1} parent=1 // pred_fallthru
      _
    // Predicated region
    $region38: #{tpu_custom_call.1} parent=1 // pred_check
      _
    $region39: #{tpu_custom_call.1} parent=1 // pred_check_branch
      %83 = sbr.rel (0) target = $region41
    $region40: #{tpu_custom_call.1} parent=1 // pred_region
      %85 = dma.done [#allocation6], 2048
    $region41: #{tpu_custom_call.1} parent=1 // pred_fallthru
      _
    // Predicated region
    $region42: #{tpu_custom_call.1} parent=1 // pred_check
      _
    $region43: #{tpu_custom_call.1} parent=1 // pred_check_branch
      %87 = sbr.rel (0) target = $region45
    $region44: #{tpu_custom_call.1} parent=1 // pred_region
      %89 = dma.done [#allocation9], 2048
    $region45: #{tpu_custom_call.1} parent=1 // pred_fallthru
      _
    %v90 = vld [vmem:[#allocation2] sm:$0xff]
    %v91 = vld [vmem:[#allocation2 + $0x8] sm:$0xff]
    %v92 = vld [vmem:[#allocation2 + $0x10] sm:$0xff]
    %v93 = vld [vmem:[#allocation2 + $0x18] sm:$0xff]
    %v94 = vld [vmem:[#allocation2 + $0x20] sm:$0xff]
    %v95 = vld [vmem:[#allocation2 + $0x28] sm:$0xff]
    %v96 = vld [vmem:[#allocation2 + $0x30] sm:$0xff]
    %v97 = vld [vmem:[#allocation2 + $0x38] sm:$0xff]
    %v98 = vld [vmem:[#allocation5] sm:$0xff]
    %v99 = vld [vmem:[#allocation5 + $0x8] sm:$0xff]
    %v100 = vld [vmem:[#allocation5 + $0x10] sm:$0xff]
    %v101 = vld [vmem:[#allocation5 + $0x18] sm:$0xff]
    %v102 = vld [vmem:[#allocation5 + $0x20] sm:$0xff]
    %v103 = vld [vmem:[#allocation5 + $0x28] sm:$0xff]
    %v104 = vld [vmem:[#allocation5 + $0x30] sm:$0xff]
    %v105 = vld [vmem:[#allocation5 + $0x38] sm:$0xff]
    %v106 = vld [vmem:[#allocation5 + $0x40] sm:$0xff]
    %v107 = vld [vmem:[#allocation5 + $0x48] sm:$0xff]
    %v108 = vld [vmem:[#allocation5 + $0x50] sm:$0xff]
    %v109 = vld [vmem:[#allocation5 + $0x58] sm:$0xff]
    %v110 = vld [vmem:[#allocation5 + $0x60] sm:$0xff]
    %v111 = vld [vmem:[#allocation5 + $0x68] sm:$0xff]
    %v112 = vld [vmem:[#allocation5 + $0x70] sm:$0xff]
    %v113 = vld [vmem:[#allocation5 + $0x78] sm:$0xff]
    %v114 = vld [vmem:[%s2] sm:$0x1]
    %v116 = vperm.slane %v114, 0
    %118 = vmatpush.msra.mxu0 %v113
    %119 = vmatpush.msra.mxu0 %v112
    %120 = vmatpush.msra.mxu0 %v111
    %121 = vmatpush.msra.mxu0 %v110
    %122 = vmatpush.msra.mxu0 %v109
    %123 = vmatpush.msra.mxu0 %v108
    %124 = vmatpush.msra.mxu0 %v107
    %125 = vmatpush.msra.mxu0 %v106
    %126 = vmatpush.msra.mxu0 %v105
    %127 = vmatpush.msra.mxu0 %v104
    %128 = vmatpush.msra.mxu0 %v103
    %129 = vmatpush.msra.mxu0 %v102
    %130 = vmatpush.msra.mxu0 %v101
    %131 = vmatpush.msra.mxu0 %v100
    %132 = vmatpush.msra.mxu0 %v99
    %133 = vmatpush.msra.mxu0 %v98
    %134 = vmatmul.f32.gmra.mxu0 %v90
    %v135 = vpop.f32.mrf.mxu0
    %v136 = vadd.f32 %v116, %v135
    %137 = vmatmul.f32.gmra.mxu0 %v91
    %v138 = vpop.f32.mrf.mxu0
    %v139 = vadd.f32 %v116, %v138
    %140 = vmatmul.f32.gmra.mxu0 %v92
    %v141 = vpop.f32.mrf.mxu0
    %v142 = vadd.f32 %v116, %v141
    %143 = vmatmul.f32.gmra.mxu0 %v93
    %v144 = vpop.f32.mrf.mxu0
    %v145 = vadd.f32 %v116, %v144
    %146 = vmatmul.f32.gmra.mxu0 %v94
    %v147 = vpop.f32.mrf.mxu0
    %v148 = vadd.f32 %v116, %v147
    %149 = vmatmul.f32.gmra.mxu0 %v95
    %v150 = vpop.f32.mrf.mxu0
    %v151 = vadd.f32 %v116, %v150
    %152 = vmatmul.f32.gmra.mxu0 %v96
    %v153 = vpop.f32.mrf.mxu0
    %v154 = vadd.f32 %v116, %v153
    %155 = vmatmul.f32.gmra.mxu0 %v97
    %v156 = vpop.f32.mrf.mxu0
    %v157 = vadd.f32 %v116, %v156
    %158 = vdwg.mxu0
    %v159 = vmax.f32 %v136, 0.0
    %v160 = vmax.f32 %v139, 0.0
    %v161 = vmax.f32 %v142, 0.0
    %v162 = vmax.f32 %v145, 0.0
    %v163 = vmax.f32 %v148, 0.0
    %v164 = vmax.f32 %v151, 0.0
    %v165 = vmax.f32 %v154, 0.0
    %v166 = vmax.f32 %v157, 0.0
    %v167 = vld [vmem:[#allocation7] sm:$0xff]
    %v168 = vld [vmem:[#allocation7 + $0x8] sm:$0xff]
    %v169 = vld [vmem:[#allocation7 + $0x10] sm:$0xff]
    %v170 = vld [vmem:[#allocation7 + $0x18] sm:$0xff]
    %v171 = vld [vmem:[#allocation7 + $0x20] sm:$0xff]
    %v172 = vld [vmem:[#allocation7 + $0x28] sm:$0xff]
    %v173 = vld [vmem:[#allocation7 + $0x30] sm:$0xff]
    %v174 = vld [vmem:[#allocation7 + $0x38] sm:$0xff]
    %v175 = vld [vmem:[#allocation7 + $0x40] sm:$0xff]
    %v176 = vld [vmem:[#allocation7 + $0x48] sm:$0xff]
    %v177 = vld [vmem:[#allocation7 + $0x50] sm:$0xff]
    %v178 = vld [vmem:[#allocation7 + $0x58] sm:$0xff]
    %v179 = vld [vmem:[#allocation7 + $0x60] sm:$0xff]
    %v180 = vld [vmem:[#allocation7 + $0x68] sm:$0xff]
    %v181 = vld [vmem:[#allocation7 + $0x70] sm:$0xff]
    %v182 = vld [vmem:[#allocation7 + $0x78] sm:$0xff]
    %v183 = vld [vmem:[%s4] sm:$0x1]
    %v185 = vperm.slane %v183, 0
    %187 = vmatpush.msra.mxu0 %v182
    %188 = vmatpush.msra.mxu0 %v181
    %189 = vmatpush.msra.mxu0 %v180
    %190 = vmatpush.msra.mxu0 %v179
    %191 = vmatpush.msra.mxu0 %v178
    %192 = vmatpush.msra.mxu0 %v177
    %193 = vmatpush.msra.mxu0 %v176
    %194 = vmatpush.msra.mxu0 %v175
    %195 = vmatpush.msra.mxu0 %v174
    %196 = vmatpush.msra.mxu0 %v173
    %197 = vmatpush.msra.mxu0 %v172
    %198 = vmatpush.msra.mxu0 %v171
    %199 = vmatpush.msra.mxu0 %v170
    %200 = vmatpush.msra.mxu0 %v169
    %201 = vmatpush.msra.mxu0 %v168
    %202 = vmatpush.msra.mxu0 %v167
    %203 = vmatmul.f32.gmra.mxu0 %v159
    %v204 = vpop.f32.mrf.mxu0
    %v205 = vadd.f32 %v185, %v204
    %206 = vmatmul.f32.gmra.mxu0 %v160
    %v207 = vpop.f32.mrf.mxu0
    %v208 = vadd.f32 %v185, %v207
    %209 = vmatmul.f32.gmra.mxu0 %v161
    %v210 = vpop.f32.mrf.mxu0
    %v211 = vadd.f32 %v185, %v210
    %212 = vmatmul.f32.gmra.mxu0 %v162
    %v213 = vpop.f32.mrf.mxu0
    %v214 = vadd.f32 %v185, %v213
    %215 = vmatmul.f32.gmra.mxu0 %v163
    %v216 = vpop.f32.mrf.mxu0
    %v217 = vadd.f32 %v185, %v216
    %218 = vmatmul.f32.gmra.mxu0 %v164
    %v219 = vpop.f32.mrf.mxu0
    %v220 = vadd.f32 %v185, %v219
    %221 = vmatmul.f32.gmra.mxu0 %v165
    %v222 = vpop.f32.mrf.mxu0
    %v223 = vadd.f32 %v185, %v222
    %224 = vmatmul.f32.gmra.mxu0 %v166
    %v225 = vpop.f32.mrf.mxu0
    %v226 = vadd.f32 %v185, %v225
    %227 = vdwg.mxu0
    %v228 = vmax.f32 %v205, 0.0
    %v229 = vmax.f32 %v208, 0.0
    %v230 = vmax.f32 %v211, 0.0
    %v231 = vmax.f32 %v214, 0.0
    %v232 = vmax.f32 %v217, 0.0
    %v233 = vmax.f32 %v220, 0.0
    %v234 = vmax.f32 %v223, 0.0
    %v235 = vmax.f32 %v226, 0.0
    %v236 = vld [vmem:[#allocation8] sm:$0xff]
    %v237 = vld [vmem:[#allocation8 + $0x8] sm:$0xff]
    %v238 = vld [vmem:[#allocation8 + $0x10] sm:$0xff]
    %v239 = vld [vmem:[#allocation8 + $0x18] sm:$0xff]
    %v240 = vld [vmem:[#allocation8 + $0x20] sm:$0xff]
    %v241 = vld [vmem:[#allocation8 + $0x28] sm:$0xff]
    %v242 = vld [vmem:[#allocation8 + $0x30] sm:$0xff]
    %v243 = vld [vmem:[#allocation8 + $0x38] sm:$0xff]
    %v244 = vld [vmem:[#allocation8 + $0x40] sm:$0xff]
    %v245 = vld [vmem:[#allocation8 + $0x48] sm:$0xff]
    %v246 = vld [vmem:[#allocation8 + $0x50] sm:$0xff]
    %v247 = vld [vmem:[#allocation8 + $0x58] sm:$0xff]
    %v248 = vld [vmem:[#allocation8 + $0x60] sm:$0xff]
    %v249 = vld [vmem:[#allocation8 + $0x68] sm:$0xff]
    %v250 = vld [vmem:[#allocation8 + $0x70] sm:$0xff]
    %v251 = vld [vmem:[#allocation8 + $0x78] sm:$0xff]
    %v252 = vld [vmem:[%s6] sm:$0x1]
    %v254 = vperm.slane %v252, 0
    %256 = vmatpush.msra.mxu0 %v251
    %257 = vmatpush.msra.mxu0 %v250
    %258 = vmatpush.msra.mxu0 %v249
    %259 = vmatpush.msra.mxu0 %v248
    %260 = vmatpush.msra.mxu0 %v247
    %261 = vmatpush.msra.mxu0 %v246
    %262 = vmatpush.msra.mxu0 %v245
    %263 = vmatpush.msra.mxu0 %v244
    %264 = vmatpush.msra.mxu0 %v243
    %265 = vmatpush.msra.mxu0 %v242
    %266 = vmatpush.msra.mxu0 %v241
    %267 = vmatpush.msra.mxu0 %v240
    %268 = vmatpush.msra.mxu0 %v239
    %269 = vmatpush.msra.mxu0 %v238
    %270 = vmatpush.msra.mxu0 %v237
    %271 = vmatpush.msra.mxu0 %v236
    %272 = vmatmul.f32.gmra.mxu0 %v228
    %v273 = vpop.f32.mrf.mxu0
    %v274 = vadd.f32 %v254, %v273
    %275 = vmatmul.f32.gmra.mxu0 %v229
    %v276 = vpop.f32.mrf.mxu0
    %v277 = vadd.f32 %v254, %v276
    %278 = vmatmul.f32.gmra.mxu0 %v230
    %v279 = vpop.f32.mrf.mxu0
    %v280 = vadd.f32 %v254, %v279
    %281 = vmatmul.f32.gmra.mxu0 %v231
    %v282 = vpop.f32.mrf.mxu0
    %v283 = vadd.f32 %v254, %v282
    %284 = vmatmul.f32.gmra.mxu0 %v232
    %v285 = vpop.f32.mrf.mxu0
    %v286 = vadd.f32 %v254, %v285
    %287 = vmatmul.f32.gmra.mxu0 %v233
    %v288 = vpop.f32.mrf.mxu0
    %v289 = vadd.f32 %v254, %v288
    %290 = vmatmul.f32.gmra.mxu0 %v234
    %v291 = vpop.f32.mrf.mxu0
    %v292 = vadd.f32 %v254, %v291
    %293 = vmatmul.f32.gmra.mxu0 %v235
    %v294 = vpop.f32.mrf.mxu0
    %v295 = vadd.f32 %v254, %v294
    %296 = vdwg.mxu0
    %297 = vst [vmem:[#allocation10] sm:$0xff] %v274
    %298 = vst [vmem:[#allocation10 + $0x8] sm:$0xff] %v277
    %299 = vst [vmem:[#allocation10 + $0x10] sm:$0xff] %v280
    %300 = vst [vmem:[#allocation10 + $0x18] sm:$0xff] %v283
    %301 = vst [vmem:[#allocation10 + $0x20] sm:$0xff] %v286
    %302 = vst [vmem:[#allocation10 + $0x28] sm:$0xff] %v289
    %303 = vst [vmem:[#allocation10 + $0x30] sm:$0xff] %v292
    %304 = vst [vmem:[#allocation10 + $0x38] sm:$0xff] %v295
    // Predicated region
    $region46: #{tpu_custom_call.1} parent=1 // pred_check
      _
    $region47: #{tpu_custom_call.1} parent=1 // pred_check_branch
      %306 = sbr.rel (0) target = $region49
    $region48: #{tpu_custom_call.1} parent=1 // pred_region
      %308 = vsyncadd [#allocation4], 0
      %s309 = sshll.u32 [#allocation10], 4
      %s310 = int_to_ptr.vmem [resolvable:$true] %s309
      %s311 = sshll.u32 %s7, 4
      %s312 = int_to_ptr.hbm [resolvable:$true] %s311
      %317 = dma.vmem_to_hbm [thread:$0]  %s310, 1024, %s312, [#allocation4], 128, 128, 8
    $region49: #{tpu_custom_call.1} parent=1 // pred_fallthru
      _
    // Predicated region
    $region50: #{tpu_custom_call.1} parent=1 // pred_check
      _
    $region51: #{tpu_custom_call.1} parent=1 // pred_check_branch
      %319 = sbr.rel (0) target = $region53
    $region52: #{tpu_custom_call.1} parent=1 // pred_region
      %321 = dma.done [#allocation4], 1024
    $region53: #{tpu_custom_call.1} parent=1 // pred_fallthru
      _
    %322 = vsyncpa [#allocation3], 1
    %323 = vsyncpa [#allocation6], 1
    %324 = vsyncpa [#allocation9], 1
    %325 = vsyncpa [#allocation4], 1

</llo_original>
